<compile_context>
chip_gen: v7x
topology: tpu7x:2x2x1
jax: 0.10.0
libtpu: 0.0.40
codegen_flags: <defaults>
</compile_context>

<pallas_src>
import functools

import jax
import jax.numpy as jnp
import numpy as np
from jax.experimental import pallas as pl
from jax.experimental.pallas import tpu as pltpu


def len_of_split_into_k_parts(L, k):
    if k <= 0:
        raise ValueError("k must be greater than 0")
    if L < k:
        raise ValueError("The iterable has fewer elements than k")
    avg = L // k
    remainder = L % k
    return [avg + (1 if i < remainder else 0) for i in range(k)]


def _build_basis_matrix(split_projections, split_lengths, horizon):
    """(k, T) matrix W with W[i, start_i + j] = w[j] for j < l_i, else 0.

    Built with jnp ops: jittable and differentiable w.r.t. split_projections.
    """
    starts = np.concatenate([[0], np.cumsum(split_lengths)[:-1]]).astype(np.int32)
    max_len = split_projections.shape[0]
    wp = split_projections[:, 0].astype(jnp.float32)            # (max_len,)

    t = jnp.arange(horizon, dtype=jnp.int32)[None, :]           # (1, T)
    s = jnp.asarray(starts, dtype=jnp.int32)[:, None]           # (k, 1)
    l = jnp.asarray(np.asarray(split_lengths, np.int32))[:, None]
    j = t - s                                                   # (k, T)
    mask = (j >= 0) & (j < l)
    gathered = wp[jnp.clip(j, 0, max_len - 1)]                  # (k, T)
    return jnp.where(mask, gathered, 0.0)                       # (k, T)


def _basis_kernel(w_ref, x_ref, o_ref, *, num_splits):
    # w_ref: (k, T, 1), x_ref: (G, T, L), o_ref: (G, k, L)
    x = x_ref[...].astype(jnp.float32)
    for kk in range(num_splits):               # k is tiny (~3): static unroll
        wk = w_ref[kk]                         # (T, 1): per-sublane weights
        # broadcast across lanes (L) and slabs (G), reduce over T (sublanes)
        red = jnp.sum(x * wk[None, :, :], axis=1, keepdims=True)   # (G, 1, L)
        o_ref[:, kk:kk + 1, :] = red.astype(o_ref.dtype)


def _pick_block(n, t, l, itemsize, vmem_budget_bytes=4 * 1024 * 1024):
    """Largest G such that the double-buffered input block fits the budget,
    G divides N (no partial blocks), and there are >= 2 grid steps when N > 1
    (so both v7x TensorCores get work)."""
    per_slab = t * l * itemsize
    g = max(1, vmem_budget_bytes // (2 * per_slab))
    g = min(n, g)
    if n > 1 and g >= n:
        g = (n + 1) // 2
    while n % g != 0:
        g -= 1
    return g


@functools.partial(jax.jit, static_argnums=2)
def splitter_basis_combination(x, split_projections, number_of_splits):
    """x: [B, C, T, L]; split_projections: [max_len, 1].

    Returns [B, C, number_of_splits, L], matching the PyTorch module.
    """
    B, C, T, L = x.shape
    k = number_of_splits
    split_lengths = len_of_split_into_k_parts(T, k)

    w = _build_basis_matrix(split_projections, split_lengths, T)   # (k, T)
    w = w.astype(x.dtype)[:, :, None]                              # (k, T, 1)

    N = B * C
    x2 = x.reshape(N, T, L)                                        # free reshape
    G = _pick_block(N, T, L, x.dtype.itemsize)
    grid = (N // G,)

    out = pl.pallas_call(
        functools.partial(_basis_kernel, num_splits=k),
        out_shape=jax.ShapeDtypeStruct((N, k, L), x.dtype),
        grid_spec=pltpu.PrefetchScalarGridSpec(
            num_scalar_prefetch=0,
            grid=grid,
            in_specs=[
                # full (k, T, 1) basis matrix, same block for every grid step
                pl.BlockSpec((k, T, 1), lambda i: (0, 0, 0)),
                # G batch-channel slabs of x per grid step
                pl.BlockSpec((G, T, L), lambda i: (i, 0, 0)),
            ],
            out_specs=pl.BlockSpec((G, k, L), lambda i: (i, 0, 0)),
        ),
        compiler_params=pltpu.CompilerParams(
            dimension_semantics=("parallel",),
            vmem_limit_bytes=32 * 1024 * 1024,
        ),
    )(w, x2)
    return out.reshape(B, C, k, L)


def _reference(x, split_projections, number_of_splits):
    """Pure-JAX reference mirroring the PyTorch forward exactly."""
    xt = jnp.swapaxes(x, -1, -2)                                  # [B, C, L, T]
    T = xt.shape[-1]
    lengths = len_of_split_into_k_parts(T, number_of_splits)
    outs, start = [], 0
    for l_i in lengths:
        part = xt[..., start:start + l_i]                         # [B,C,L,l_i]
        comb = part @ split_projections[:l_i, :]                  # [B,C,L,1]
        outs.append(jnp.swapaxes(comb, -1, -2))                   # [B,C,1,L]
        start += l_i
    return jnp.concatenate(outs, axis=-2)                         # [B,C,k,L]


if __name__ == "__main__":
    key = jax.random.PRNGKey(0)
    B, C, T, L = 2, 4, 16, 32          # horizon = T = 16
    number_of_splits = 3               # split lengths: [6, 5, 5]

    k_x, k_w = jax.random.split(key)
    x = jax.random.normal(k_x, (B, C, T, L), dtype=jnp.float32)

    max_len = int(np.max(len_of_split_into_k_parts(T, number_of_splits)))
    # torch.rand(max_len).unsqueeze(-1) analogue: uniform [0,1), shape (max_len, 1)
    split_projections = jax.random.uniform(k_w, (max_len, 1), dtype=jnp.float32)

    out = splitter_basis_combination(x, split_projections, number_of_splits)
    out = jax.block_until_ready(out)

    ref = _reference(x, split_projections, number_of_splits)
    assert out.shape == (B, C, number_of_splits, L), out.shape
    np.testing.assert_allclose(np.asarray(out), np.asarray(ref), rtol=1e-5, atol=1e-5)

    print("KERNEL_OK")
</pallas_src>

<mosaic_0001>
module attributes {stable_mosaic.version = 11 : i64} {
  func.func @_basis_kernel(%arg0: i32, %arg1: memref<3x16x1xf32, #tpu.memory_space<vmem>>, %arg2: memref<4x16x32xf32, #tpu.memory_space<vmem>>, %arg3: memref<4x3x32xf32, #tpu.memory_space<vmem>>) attributes {dimension_semantics = [#tpu.dimension_semantics<parallel>], iteration_bounds = array<i64: 2>, scalar_prefetch = 0 : i64, scratch_operands = 0 : i64, tpu.core_type = #tpu.core_type<tc>, window_params = [{pipeline_mode = #tpu.pipeline_mode<synchronous>, transform_indices = @transform_0, window_bounds = array<i64: 3, 16, 1>}, {transform_indices = @transform_1, window_bounds = array<i64: 4, 16, 32>}, {transform_indices = @transform_2, window_bounds = array<i64: 4, 3, 32>}]} {
    %c0 = arith.constant 0 : index
    %c0_0 = arith.constant 0 : index
    %c0_1 = arith.constant 0 : index
    %0 = vector.load %arg2[%c0, %c0_0, %c0_1] : memref<4x16x32xf32, #tpu.memory_space<vmem>>, vector<4x16x32xf32>
    %c0_2 = arith.constant 0 : index
    %c0_3 = arith.constant 0 : index
    %c0_4 = arith.constant 0 : index
    %1 = vector.load %arg1[%c0_2, %c0_3, %c0_4] : memref<3x16x1xf32, #tpu.memory_space<vmem>>, vector<1x16x1xf32>
    %2 = vector.shape_cast %1 : vector<1x16x1xf32> to vector<16x1xf32>
    %3 = vector.shape_cast %2 : vector<16x1xf32> to vector<1x16x1xf32>
    %4 = vector.broadcast %3 : vector<1x16x1xf32> to vector<4x16x32xf32>
    %5 = arith.mulf %0, %4 : vector<4x16x32xf32>
    %cst = arith.constant dense<0.000000e+00> : vector<4x32xf32>
    %6 = vector.multi_reduction <add>, %5, %cst [1] : vector<4x16x32xf32> to vector<4x32xf32>
    %7 = vector.shape_cast %6 : vector<4x32xf32> to vector<4x1x32xf32>
    %c0_5 = arith.constant 0 : index
    %c0_6 = arith.constant 0 : index
    %c0_7 = arith.constant 0 : index
    %8 = vector.load %arg3[%c0_5, %c0_6, %c0_7] : memref<4x3x32xf32, #tpu.memory_space<vmem>>, vector<4x1x32xf32>
    tpu.vector_store %arg3[%c0_5, %c0_6, %c0_7], %7 {strides = array<i32>} : memref<4x3x32xf32, #tpu.memory_space<vmem>>, vector<4x1x32xf32>,
    %c1 = arith.constant 1 : index
    %c0_8 = arith.constant 0 : index
    %c0_9 = arith.constant 0 : index
    %9 = vector.load %arg1[%c1, %c0_8, %c0_9] : memref<3x16x1xf32, #tpu.memory_space<vmem>>, vector<1x16x1xf32>
    %10 = vector.shape_cast %9 : vector<1x16x1xf32> to vector<16x1xf32>
    %11 = vector.shape_cast %10 : vector<16x1xf32> to vector<1x16x1xf32>
    %12 = vector.broadcast %11 : vector<1x16x1xf32> to vector<4x16x32xf32>
    %13 = arith.mulf %0, %12 : vector<4x16x32xf32>
    %cst_10 = arith.constant dense<0.000000e+00> : vector<4x32xf32>
    %14 = vector.multi_reduction <add>, %13, %cst_10 [1] : vector<4x16x32xf32> to vector<4x32xf32>
    %15 = vector.shape_cast %14 : vector<4x32xf32> to vector<4x1x32xf32>
    %c0_11 = arith.constant 0 : index
    %c1_12 = arith.constant 1 : index
    %c0_13 = arith.constant 0 : index
    %16 = vector.load %arg3[%c0_11, %c1_12, %c0_13] : memref<4x3x32xf32, #tpu.memory_space<vmem>>, vector<4x1x32xf32>
    tpu.vector_store %arg3[%c0_11, %c1_12, %c0_13], %15 {strides = array<i32>} : memref<4x3x32xf32, #tpu.memory_space<vmem>>, vector<4x1x32xf32>,
    %c2 = arith.constant 2 : index
    %c0_14 = arith.constant 0 : index
    %c0_15 = arith.constant 0 : index
    %17 = vector.load %arg1[%c2, %c0_14, %c0_15] : memref<3x16x1xf32, #tpu.memory_space<vmem>>, vector<1x16x1xf32>
    %18 = vector.shape_cast %17 : vector<1x16x1xf32> to vector<16x1xf32>
    %19 = vector.shape_cast %18 : vector<16x1xf32> to vector<1x16x1xf32>
    %20 = vector.broadcast %19 : vector<1x16x1xf32> to vector<4x16x32xf32>
    %21 = arith.mulf %0, %20 : vector<4x16x32xf32>
    %cst_16 = arith.constant dense<0.000000e+00> : vector<4x32xf32>
    %22 = vector.multi_reduction <add>, %21, %cst_16 [1] : vector<4x16x32xf32> to vector<4x32xf32>
    %23 = vector.shape_cast %22 : vector<4x32xf32> to vector<4x1x32xf32>
    %c0_17 = arith.constant 0 : index
    %c2_18 = arith.constant 2 : index
    %c0_19 = arith.constant 0 : index
    %24 = vector.load %arg3[%c0_17, %c2_18, %c0_19] : memref<4x3x32xf32, #tpu.memory_space<vmem>>, vector<4x1x32xf32>
    tpu.vector_store %arg3[%c0_17, %c2_18, %c0_19], %23 {strides = array<i32>} : memref<4x3x32xf32, #tpu.memory_space<vmem>>, vector<4x1x32xf32>,
    return
  }
  func.func @transform_0(%arg0: i32) -> (i32, i32, i32) {
    %c0_i32 = arith.constant 0 : i32
    %c0_i32_0 = arith.constant 0 : i32
    %c0_i32_1 = arith.constant 0 : i32
    %c0_i32_2 = arith.constant 0 : i32
    return %c0_i32, %c0_i32_0, %c0_i32_1 : i32, i32, i32
  }
  func.func @transform_1(%arg0: i32) -> (i32, i32, i32) {
    %c0_i32 = arith.constant 0 : i32
    %c0_i32_0 = arith.constant 0 : i32
    %c0_i32_1 = arith.constant 0 : i32
    return %arg0, %c0_i32, %c0_i32_0 : i32, i32, i32
  }
  func.func @transform_2(%arg0: i32) -> (i32, i32, i32) {
    %c0_i32 = arith.constant 0 : i32
    %c0_i32_0 = arith.constant 0 : i32
    %c0_i32_1 = arith.constant 0 : i32
    return %arg0, %c0_i32, %c0_i32_0 : i32, i32, i32
  }
}

</mosaic_0001>

<llo_original>
// kernel: splitter_basis_combination.1
$region0: #{splitter_basis_combination.1}
  #allocation0 [shape = 'u32[]', space=smem, size = 0x4, offset = 0x4, fixed_abs, tag = 'smem constant byte address 0x4 - core index']
  #allocation1 [shape = 'u32[144,128]{1,0:T(1,128)}', space=vmem, size = 0x12000, scoped, tag = 'internal scratch']
  %s0 = inlined_call_operand.vmem [shape: f32[3,16,1], index: 0, kind: input, shape index: {}]
  %s1 = inlined_call_operand.vmem [shape: f32[8,16,32], index: 1, kind: input, shape index: {}]
  %s2 = inlined_call_operand.vmem [shape: f32[8,3,32], index: 2, kind: output, shape index: {}]
  %s3 = sld [smem:[#allocation0]]
  $region41: #{splitter_basis_combination.1} parent=0
    _
  %s5 = ssub.s32 1, %s3
  %s6 = scalar_select 0, %s5, %s3
  loop: start=0, step=1, limit=4
  $region2: #{splitter_basis_combination.1} parent=0 // loop_pre_header
    _
  $region3: #{splitter_basis_combination.1} parent=0 // loop_header
    %s8 = sphi 0, %s12
    %p9 = scmp.ge.s32.totalorder %s8, 4
    %s16 = sphi 0, %s16
    %s18 = sphi 0, %s16
    %s19 = sphi 0, %s18
    %s33 = sphi 0, %s19
    %s39 = sphi 0, %s41
    %s42 = sphi 0, %s39
    %s43 = sphi 0, %s42
    %s59 = sphi 0, %s43
    %s65 = sphi 0, %s67
    %s68 = sphi 0, %s65
    %s69 = sphi 0, %s68
    %s85 = sphi 0, %s69
  $region4: #{splitter_basis_combination.1} parent=0 // loop_header_branch
    %11 = sbr.rel (%p9) target = $region8
  $region5: #{splitter_basis_combination.1} parent=0 // loop_body
    %s13 = ssub.s32 %s8, 1
    %s14 = ssub.s32 %s8, 2
    %s15 = sadd.s32 %s8, 1
    %s17 = sadd.s32 %s16, 1
    %p20 = scmp.eq.s32.totalorder %s8, 1
    %p21 = scmp.ne.s32.totalorder %s16, %s18
    %p22 = scmp.eq.s32.totalorder %s8, 0
    %p23 = por %p21, %p22
    %p24 = scmp.ne.s32.totalorder %s16, %s18
    %p25 = scmp.eq.s32.totalorder %s13, 1
    %p26 = por %p24, %p25
    %p27 = scmp.ne.s32.totalorder %s18, %s19
    %p28 = scmp.eq.s32.totalorder %s13, 0
    %p29 = por %p27, %p28
    %p30 = scmp.ne.s32.totalorder %s18, %s19
    %p31 = scmp.eq.s32.totalorder %s14, 1
    %p32 = por %p30, %p31
    %p34 = scmp.ne.s32.totalorder %s19, %s33
    %p35 = scmp.eq.s32.totalorder %s14, 0
    %p36 = por %p34, %p35
    %s37 = ssub.s32 %s8, %s15
    %p38 = scmp.eq.s32.totalorder %s37, 0
    %s40 = sadd.s32 %s39, 1
    %s41 = scalar_select %p38, %s39, %s40
    %p44 = pneg %p38
    %p45 = scmp.eq.s32.totalorder %s8, 1
    %p46 = por %p44, %p45
    %p47 = scmp.ne.s32.totalorder %s39, %s42
    %p48 = scmp.eq.s32.totalorder %s8, 0
    %p49 = por %p47, %p48
    %p50 = scmp.ne.s32.totalorder %s39, %s42
    %p51 = scmp.eq.s32.totalorder %s13, 1
    %p52 = por %p50, %p51
    %p53 = scmp.ne.s32.totalorder %s42, %s43
    %p54 = scmp.eq.s32.totalorder %s13, 0
    %p55 = por %p53, %p54
    %p56 = scmp.ne.s32.totalorder %s42, %s43
    %p57 = scmp.eq.s32.totalorder %s14, 1
    %p58 = por %p56, %p57
    %p60 = scmp.ne.s32.totalorder %s43, %s59
    %p61 = scmp.eq.s32.totalorder %s14, 0
    %p62 = por %p60, %p61
    %s63 = ssub.s32 %s8, %s15
    %p64 = scmp.eq.s32.totalorder %s63, 0
    %s66 = sadd.s32 %s65, 1
    %s67 = scalar_select %p64, %s65, %s66
    %p70 = pneg %p64
    %p71 = scmp.eq.s32.totalorder %s8, 1
    %p72 = por %p70, %p71
    %p73 = scmp.ne.s32.totalorder %s65, %s68
    %p74 = scmp.eq.s32.totalorder %s8, 0
    %p75 = por %p73, %p74
    %p76 = scmp.ne.s32.totalorder %s65, %s68
    %p77 = scmp.eq.s32.totalorder %s13, 1
    %p78 = por %p76, %p77
    %p79 = scmp.ne.s32.totalorder %s68, %s69
    %p80 = scmp.eq.s32.totalorder %s13, 0
    %p81 = por %p79, %p80
    %p82 = scmp.ne.s32.totalorder %s68, %s69
    %p83 = scmp.eq.s32.totalorder %s14, 1
    %p84 = por %p82, %p83
    %p86 = scmp.ne.s32.totalorder %s69, %s85
    %p87 = scmp.eq.s32.totalorder %s14, 0
    %p88 = por %p86, %p87
    %p89 = scmp.le.s32.totalorder 1, %s8
    %p90 = scmp.lt.s32.totalorder %s8, 3
    %p91 = pnand %p89, %p90
    %p92 = pneg %p91
    // Predicated region
    $region9: #{splitter_basis_combination.1} parent=5 // pred_check
      _
    $region10: #{splitter_basis_combination.1} parent=5 // pred_check_branch
      %94 = sbr.rel (%p91) target = $region12
    $region11: #{splitter_basis_combination.1} parent=5 // pred_region
      %s95 = ssub.s32 %s8, 1
      // Predicated region
      $region13: #{splitter_basis_combination.1} parent=11 // pred_check
        %p96 = pneg %p29
      $region14: #{splitter_basis_combination.1} parent=11 // pred_check_branch
        %98 = sbr.rel (%p96) target = $region16
      $region15: #{splitter_basis_combination.1} parent=11 // pred_region
        _
      $region16: #{splitter_basis_combination.1} parent=11 // pred_fallthru
        _
    $region12: #{splitter_basis_combination.1} parent=5 // pred_fallthru
      _
    %p99 = scmp.lt.s32.totalorder %s8, 2
    // Predicated region
    $region17: #{splitter_basis_combination.1} parent=5 // pred_check
      %p100 = pneg %p99
    $region18: #{splitter_basis_combination.1} parent=5 // pred_check_branch
      %102 = sbr.rel (%p100) target = $region20
    $region19: #{splitter_basis_combination.1} parent=5 // pred_region
      // Predicated region
      $region21: #{splitter_basis_combination.1} parent=19 // pred_check
        %p103 = pneg %p49
      $region22: #{splitter_basis_combination.1} parent=19 // pred_check_branch
        %105 = sbr.rel (%p103) target = $region24
      $region23: #{splitter_basis_combination.1} parent=19 // pred_region
        %s106 = smul.u32 4, %s8
        %p107 = scmp.lt.s32.totalorder %s106, 7
        %s108 = scalar_select %p107, %s106, 7
        %s109 = smul.addr %s108, 2
        %s110 = smul.addr %s109, 8
        %s111 = scalar_lea.vmem %s1, %s110
        %s112 = smul.u32 4, %s8
      $region24: #{splitter_basis_combination.1} parent=19 // pred_fallthru
        _
    $region20: #{splitter_basis_combination.1} parent=5 // pred_fallthru
      _
    %p113 = scmp.le.s32.totalorder 1, %s8
    %p114 = scmp.lt.s32.totalorder %s8, 3
    %p115 = pnand %p113, %p114
    %p116 = pneg %p115
    // Predicated region
    $region25: #{splitter_basis_combination.1} parent=5 // pred_check
      _
    $region26: #{splitter_basis_combination.1} parent=5 // pred_check_branch
      %118 = sbr.rel (%p115) target = $region28
    $region27: #{splitter_basis_combination.1} parent=5 // pred_region
      %s119 = ssub.s32 %s8, 1
      %p120 = pneg %p29
      %p121 = pneg %p26
      %s122 = smul.u32 4, %s13
      %p123 = scmp.lt.s32.totalorder %s122, 7
      %s124 = scalar_select %p123, %s122, 7
      %s125 = smul.addr %s124, 2
      %s126 = smul.addr %s125, 8
      %s127 = scalar_lea.vmem %s1, %s126
      %p128 = pneg %p55
      %p129 = pneg %p52
      %p130 = pneg %p81
      %p131 = pneg %p78
      %s132 = smul.u32 4, %s13
      %p133 = scmp.lt.s32.totalorder %s132, 7
      %s134 = scalar_select %p133, %s132, 7
      %s135 = smul.addr %s134, 4
      %s136 = scalar_lea.vmem %s2, %s135
      %s137 = smul.u32 4, %s13
      %p138 = scmp.lt.s32.totalorder %s137, 7
      %s139 = scalar_select %p138, %s137, 7
      %s140 = smul.addr %s139, 2
      %s141 = smul.addr %s140, 8
      %s142 = scalar_lea.vmem %s1, %s141
      %s143 = smul.u32 4, %s13
      %s144 = smul.u32 4, %s13
      %p145 = scmp.lt.s32.totalorder %s144, 7
      %s146 = scalar_select %p145, %s144, 7
      %s147 = smul.addr %s146, 4
      %s148 = scalar_lea.vmem %s2, %s147
      %s149 = smul.u32 4, %s13
      %v150 = vld [vmem:[%s142] sm:$0xff]
      %v151 = vld [vmem:[%s142 + $0x8] sm:$0xff]
      %v152 = vld [vmem:[%s142 + $0x10] sm:$0xff]
      %v153 = vld [vmem:[%s142 + $0x18] sm:$0xff]
      %v154 = vld [vmem:[%s142 + $0x20] sm:$0xff]
      %v155 = vld [vmem:[%s142 + $0x28] sm:$0xff]
      %v156 = vld [vmem:[%s142 + $0x30] sm:$0xff]
      %v157 = vld [vmem:[%s142 + $0x38] sm:$0xff]
      %v158 = vld [vmem:[%s0] sm:$0xff]
      %v159 = vld [vmem:[%s0 + $0x8] sm:$0xff]
      %161 = vset.pattern.permute.xlu0 0
      %162 = vperm.xlu0 %161, %v158
      %v163 = vpop.permute.xlu0 %162
      %166 = vset.pattern.permute.xlu0 0
      %167 = vperm.xlu0 %166, %v159
      %v168 = vpop.permute.xlu0 %167
      %v170 = vmul.f32 %v150, %v163
      %v171 = vmul.f32 %v151, %v168
      %v172 = vmul.f32 %v152, %v163
      %v173 = vmul.f32 %v153, %v168
      %v174 = vmul.f32 %v154, %v163
      %v175 = vmul.f32 %v155, %v168
      %v176 = vmul.f32 %v156, %v163
      %v177 = vmul.f32 %v157, %v168
      %vm178 = vcmask 261120
      %v179 = vsel %vm178, %v170, 0.0
      %v180 = vsel %vm178, %v171, 0.0
      %v181 = vadd.f32 %v179, %v180
      %v182 = vrot.slane %v181, 4
      %v183 = vadd.f32 %v181, %v182
      %v184 = vrot.slane %v183, 2
      %v185 = vadd.f32 %v183, %v184
      %v186 = vrot.slane %v185, 1
      %v187 = vadd.f32 %v185, %v186
      %v188 = vsel %vm178, %v172, 0.0
      %v189 = vsel %vm178, %v173, 0.0
      %v190 = vadd.f32 %v188, %v189
      %v191 = vrot.slane %v190, 4
      %v192 = vadd.f32 %v190, %v191
      %v193 = vrot.slane %v192, 2
      %v194 = vadd.f32 %v192, %v193
      %v195 = vrot.slane %v194, 1
      %v196 = vadd.f32 %v194, %v195
      %v197 = vsel %vm178, %v174, 0.0
      %v198 = vsel %vm178, %v175, 0.0
      %v199 = vadd.f32 %v197, %v198
      %v200 = vrot.slane %v199, 4
      %v201 = vadd.f32 %v199, %v200
      %v202 = vrot.slane %v201, 2
      %v203 = vadd.f32 %v201, %v202
      %v204 = vrot.slane %v203, 1
      %v205 = vadd.f32 %v203, %v204
      %v206 = vsel %vm178, %v176, 0.0
      %v207 = vsel %vm178, %v177, 0.0
      %v208 = vadd.f32 %v206, %v207
      %v209 = vrot.slane %v208, 4
      %v210 = vadd.f32 %v208, %v209
      %v211 = vrot.slane %v210, 2
      %v212 = vadd.f32 %v210, %v211
      %v213 = vrot.slane %v212, 1
      %v214 = vadd.f32 %v212, %v213
      %vm215 = vcmask 253952
      %216 = vst.msk [vmem:[%s148] sm:$0x1] %vm215, %v187
      %217 = vst.msk [vmem:[%s148 + $0x4] sm:$0x1] %vm215, %v196
      %218 = vst.msk [vmem:[%s148 + $0x8] sm:$0x1] %vm215, %v205
      %219 = vst.msk [vmem:[%s148 + $0xc] sm:$0x1] %vm215, %v214
      %s220 = scalar_lea.vmem %s0, 16
      %v221 = vld [vmem:[%s220] sm:$0xff]
      %v222 = vld [vmem:[%s220 + $0x8] sm:$0xff]
      %224 = vset.pattern.permute.xlu0 0
      %225 = vperm.xlu0 %224, %v221
      %v226 = vpop.permute.xlu0 %225
      %229 = vset.pattern.permute.xlu0 0
      %230 = vperm.xlu0 %229, %v222
      %v231 = vpop.permute.xlu0 %230
      %v233 = vmul.f32 %v150, %v226
      %v234 = vmul.f32 %v151, %v231
      %v235 = vmul.f32 %v152, %v226
      %v236 = vmul.f32 %v153, %v231
      %v237 = vmul.f32 %v154, %v226
      %v238 = vmul.f32 %v155, %v231
      %v239 = vmul.f32 %v156, %v226
      %v240 = vmul.f32 %v157, %v231
      %v241 = vsel %vm178, %v233, 0.0
      %v242 = vsel %vm178, %v234, 0.0
      %v243 = vadd.f32 %v241, %v242
      %v244 = vrot.slane %v243, 4
      %v245 = vadd.f32 %v243, %v244
      %v246 = vrot.slane %v245, 2
      %v247 = vadd.f32 %v245, %v246
      %v248 = vrot.slane %v247, 1
      %v249 = vadd.f32 %v247, %v248
      %v250 = vsel %vm178, %v235, 0.0
      %v251 = vsel %vm178, %v236, 0.0
      %v252 = vadd.f32 %v250, %v251
      %v253 = vrot.slane %v252, 4
      %v254 = vadd.f32 %v252, %v253
      %v255 = vrot.slane %v254, 2
      %v256 = vadd.f32 %v254, %v255
      %v257 = vrot.slane %v256, 1
      %v258 = vadd.f32 %v256, %v257
      %v259 = vsel %vm178, %v237, 0.0
      %v260 = vsel %vm178, %v238, 0.0
      %v261 = vadd.f32 %v259, %v260
      %v262 = vrot.slane %v261, 4
      %v263 = vadd.f32 %v261, %v262
      %v264 = vrot.slane %v263, 2
      %v265 = vadd.f32 %v263, %v264
      %v266 = vrot.slane %v265, 1
      %v267 = vadd.f32 %v265, %v266
      %v268 = vsel %vm178, %v239, 0.0
      %v269 = vsel %vm178, %v240, 0.0
      %v270 = vadd.f32 %v268, %v269
      %v271 = vrot.slane %v270, 4
      %v272 = vadd.f32 %v270, %v271
      %v273 = vrot.slane %v272, 2
      %v274 = vadd.f32 %v272, %v273
      %v275 = vrot.slane %v274, 1
      %v276 = vadd.f32 %v274, %v275
      %277 = vst.msk [vmem:[%s148 + $0x1] sm:$0x1] %vm215, %v249
      %278 = vst.msk [vmem:[%s148 + $0x5] sm:$0x1] %vm215, %v258
      %279 = vst.msk [vmem:[%s148 + $0x9] sm:$0x1] %vm215, %v267
      %280 = vst.msk [vmem:[%s148 + $0xd] sm:$0x1] %vm215, %v276
      %s281 = scalar_lea.vmem %s0, 32
      %v282 = vld [vmem:[%s281] sm:$0xff]
      %v283 = vld [vmem:[%s281 + $0x8] sm:$0xff]
      %285 = vset.pattern.permute.xlu0 0
      %286 = vperm.xlu0 %285, %v282
      %v287 = vpop.permute.xlu0 %286
      %290 = vset.pattern.permute.xlu0 0
      %291 = vperm.xlu0 %290, %v283
      %v292 = vpop.permute.xlu0 %291
      %v294 = vmul.f32 %v150, %v287
      %v295 = vmul.f32 %v151, %v292
      %v296 = vmul.f32 %v152, %v287
      %v297 = vmul.f32 %v153, %v292
      %v298 = vmul.f32 %v154, %v287
      %v299 = vmul.f32 %v155, %v292
      %v300 = vmul.f32 %v156, %v287
      %v301 = vmul.f32 %v157, %v292
      %v302 = vsel %vm178, %v294, 0.0
      %v303 = vsel %vm178, %v295, 0.0
      %v304 = vadd.f32 %v302, %v303
      %v305 = vrot.slane %v304, 4
      %v306 = vadd.f32 %v304, %v305
      %v307 = vrot.slane %v306, 2
      %v308 = vadd.f32 %v306, %v307
      %v309 = vrot.slane %v308, 1
      %v310 = vadd.f32 %v308, %v309
      %v311 = vsel %vm178, %v296, 0.0
      %v312 = vsel %vm178, %v297, 0.0
      %v313 = vadd.f32 %v311, %v312
      %v314 = vrot.slane %v313, 4
      %v315 = vadd.f32 %v313, %v314
      %v316 = vrot.slane %v315, 2
      %v317 = vadd.f32 %v315, %v316
      %v318 = vrot.slane %v317, 1
      %v319 = vadd.f32 %v317, %v318
      %v320 = vsel %vm178, %v298, 0.0
      %v321 = vsel %vm178, %v299, 0.0
      %v322 = vadd.f32 %v320, %v321
      %v323 = vrot.slane %v322, 4
      %v324 = vadd.f32 %v322, %v323
      %v325 = vrot.slane %v324, 2
      %v326 = vadd.f32 %v324, %v325
      %v327 = vrot.slane %v326, 1
      %v328 = vadd.f32 %v326, %v327
      %v329 = vsel %vm178, %v300, 0.0
      %v330 = vsel %vm178, %v301, 0.0
      %v331 = vadd.f32 %v329, %v330
      %v332 = vrot.slane %v331, 4
      %v333 = vadd.f32 %v331, %v332
      %v334 = vrot.slane %v333, 2
      %v335 = vadd.f32 %v333, %v334
      %v336 = vrot.slane %v335, 1
      %v337 = vadd.f32 %v335, %v336
      %338 = vst.msk [vmem:[%s148 + $0x2] sm:$0x1] %vm215, %v310
      %339 = vst.msk [vmem:[%s148 + $0x6] sm:$0x1] %vm215, %v319
      %340 = vst.msk [vmem:[%s148 + $0xa] sm:$0x1] %vm215, %v328
      %341 = vst.msk [vmem:[%s148 + $0xe] sm:$0x1] %vm215, %v337
      %s342 = smul.u32 4, %s13
      %p343 = scmp.lt.s32.totalorder %s342, 7
      %s344 = scalar_select %p343, %s342, 7
      %s345 = smul.addr %s344, 4
      %s346 = scalar_lea.vmem %s2, %s345
      // Predicated region
      $region29: #{splitter_basis_combination.1} parent=27 // pred_check
        %p347 = pneg %p78
      $region30: #{splitter_basis_combination.1} parent=27 // pred_check_branch
        %349 = sbr.rel (%p347) target = $region32
      $region31: #{splitter_basis_combination.1} parent=27 // pred_region
        %s350 = smul.u32 4, %s13
      $region32: #{splitter_basis_combination.1} parent=27 // pred_fallthru
        _
    $region28: #{splitter_basis_combination.1} parent=5 // pred_fallthru
      _
    %p351 = scmp.le.s32.totalorder 2, %s8
    // Predicated region
    $region33: #{splitter_basis_combination.1} parent=5 // pred_check
      %p352 = pneg %p351
    $region34: #{splitter_basis_combination.1} parent=5 // pred_check_branch
      %354 = sbr.rel (%p352) target = $region36
    $region35: #{splitter_basis_combination.1} parent=5 // pred_region
      %s355 = ssub.s32 %s8, 2
      // Predicated region
      $region37: #{splitter_basis_combination.1} parent=35 // pred_check
        %p356 = pneg %p84
      $region38: #{splitter_basis_combination.1} parent=35 // pred_check_branch
        %358 = sbr.rel (%p356) target = $region40
      $region39: #{splitter_basis_combination.1} parent=35 // pred_region
        %s359 = smul.u32 4, %s14
        %p360 = scmp.lt.s32.totalorder %s359, 7
        %s361 = scalar_select %p360, %s359, 7
        %s362 = smul.addr %s361, 4
        %s363 = scalar_lea.vmem %s2, %s362
      $region40: #{splitter_basis_combination.1} parent=35 // pred_fallthru
        _
    $region36: #{splitter_basis_combination.1} parent=5 // pred_fallthru
      _
  $region6: #{splitter_basis_combination.1} parent=0 // loop_footer
    %s12 = sadd.s32 1, %s8
  $region7: #{splitter_basis_combination.1} parent=0 // loop_footer_branch
    %7 = sbr.rel target = $region3
  $region8: #{splitter_basis_combination.1} parent=0 // loop_exit
    _

</llo_original>
